<compile_context>
chip_gen: v5e
topology: v5e:2x2
jax: 0.10.0
libtpu: 0.0.40
codegen_flags: <defaults>
</compile_context>

<pallas_src>
import functools
import math

import jax
import jax.numpy as jnp
from jax.experimental import pallas as pl
from jax.experimental.pallas import tpu as pltpu

LANE = 128  # lane-dense padded feature width (TPU vreg lane count)


# ----------------------------------------------------------------------------
# Pallas kernel: one-hot gather -> Linear -> Swish -> Linear, all VMEM-resident
# ----------------------------------------------------------------------------
def _time_embed_kernel(t_ref, wtab_ref, bias_ref, out_ref, *, T):
    # t_ref:    [B, 1]              int32  timestep indices
    # wtab_ref: [T + 2*LANE, LANE]  f32    rows [0:T)            -> sinusoid table (cols >= d_model are 0)
    #                                      rows [T:T+LANE)       -> W1, zero-padded to [128,128]
    #                                      rows [T+LANE:T+2*LANE)-> W2, zero-padded to [128,128]
    # bias_ref: [2, LANE]           f32    row 0 = b1 (padded), row 1 = b2 (padded)
    # out_ref:  [B, LANE]           f32    cols >= dim are zero
    B = out_ref.shape[0]

    # --- embedding lookup fused in-kernel: one-hot(t) @ table on the MXU ---
    t = t_ref[...]                                                 # [B, 1] int32
    cols = jax.lax.broadcasted_iota(jnp.int32, (B, T), 1)          # [B, T]
    onehot = (t == cols).astype(jnp.float32)                       # [B, T]
    table = wtab_ref[0:T, :]                                       # [T, LANE] (static view)
    emb = jnp.dot(onehot, table, preferred_element_type=jnp.float32)  # [B, LANE]

    # --- MLP: Linear -> Swish -> Linear (everything 128-lane dense) ---
    w1 = wtab_ref[T:T + LANE, :]                                   # [LANE, LANE]
    w2 = wtab_ref[T + LANE:T + 2 * LANE, :]                        # [LANE, LANE]

    h = jnp.dot(emb, w1, preferred_element_type=jnp.float32) + bias_ref[0:1, :]
    # Swish: x * sigmoid(x). Exact sigmoid (exp goes to EUP; the divide is
    # negligible at [8,128] and keeps the result bit-accurate vs. reference).
    h = h * (1.0 / (1.0 + jnp.exp(-h)))

    y = jnp.dot(h, w2, preferred_element_type=jnp.float32) + bias_ref[1:2, :]
    out_ref[...] = y


# ----------------------------------------------------------------------------
# One-time parameter packing (do NOT call per forward)
# ----------------------------------------------------------------------------
def prepare_params(table, w1, b1, w2, b2):
    """Pack table/W1/W2 into one lane-dense VMEM operand, biases into another."""
    T, d_model = table.shape
    dim = w1.shape[1]
    assert d_model <= LANE and dim <= LANE
    table_p = jnp.zeros((T, LANE), jnp.float32).at[:, :d_model].set(table)
    w1_p = jnp.zeros((LANE, LANE), jnp.float32).at[:d_model, :dim].set(w1)
    w2_p = jnp.zeros((LANE, LANE), jnp.float32).at[:dim, :dim].set(w2)
    wtab = jnp.concatenate([table_p, w1_p, w2_p], axis=0)          # [T + 256, 128]
    bias = (jnp.zeros((2, LANE), jnp.float32)
            .at[0, :dim].set(b1)
            .at[1, :dim].set(b2))
    return wtab, bias


# ----------------------------------------------------------------------------
# Forward wrapper
# ----------------------------------------------------------------------------
@functools.partial(jax.jit, static_argnames=("T", "dim"))
def time_embedding_forward(t, wtab, bias, *, T, dim):
    """t: int32 [B] timestep indices. Returns float32 [B, dim]."""
    B = t.shape[0]
    kernel = functools.partial(_time_embed_kernel, T=T)
    out = pl.pallas_call(
        kernel,
        out_shape=jax.ShapeDtypeStruct((B, LANE), jnp.float32),
        in_specs=[
            pl.BlockSpec(memory_space=pltpu.MemorySpace.VMEM),  # t  [B,1] int32
            pl.BlockSpec(memory_space=pltpu.MemorySpace.VMEM),  # packed table+W1+W2
            pl.BlockSpec(memory_space=pltpu.MemorySpace.VMEM),  # packed biases
        ],
        out_specs=pl.BlockSpec(memory_space=pltpu.MemorySpace.VMEM),
        # Grid-less on purpose: B=8 fits one TensorCore invocation; a batch
        # grid would only add per-step overhead at these shapes.
    )(t.reshape(B, 1).astype(jnp.int32), wtab, bias)
    return out[:, :dim]  # drop zero-padded lanes (free under jit)


# ----------------------------------------------------------------------------
# Parameter construction (deterministic, mirrors TimeEmbedding.__init__)
# ----------------------------------------------------------------------------
def make_sinusoidal_table(T, d_model):
    assert d_model % 2 == 0
    freq = jnp.arange(0, d_model, 2, dtype=jnp.float32) / d_model * math.log(10000.0)
    freq = jnp.exp(-freq)                                   # [d_model // 2]
    pos = jnp.arange(T, dtype=jnp.float32)                  # [T]
    ang = pos[:, None] * freq[None, :]                      # [T, d_model // 2]
    emb = jnp.stack([jnp.sin(ang), jnp.cos(ang)], axis=-1)  # [T, d_model // 2, 2]
    return emb.reshape(T, d_model)                          # [T, d_model]


def xavier_uniform(key, fan_in, fan_out):
    # Weight in [in, out] layout (transposed vs. torch nn.Linear) so y = x @ W + b.
    bound = math.sqrt(6.0 / (fan_in + fan_out))
    return jax.random.uniform(
        key, (fan_in, fan_out), dtype=jnp.float32, minval=-bound, maxval=bound
    )


# ----------------------------------------------------------------------------
# Main
# ----------------------------------------------------------------------------
if __name__ == "__main__":
    T, d_model, dim = 16, 32, 64
    B = 8

    key = jax.random.PRNGKey(0)
    k_w1, k_w2, k_t = jax.random.split(key, 3)

    table = make_sinusoidal_table(T, d_model)               # fixed embedding
    w1 = xavier_uniform(k_w1, d_model, dim)                 # Linear(d_model, dim)
    b1 = jnp.zeros((dim,), jnp.float32)
    w2 = xavier_uniform(k_w2, dim, dim)                     # Linear(dim, dim)
    b2 = jnp.zeros((dim,), jnp.float32)

    t = jax.random.randint(k_t, (B,), 0, T, dtype=jnp.int32)

    # One-time packing into lane-dense VMEM operands.
    wtab, bias = prepare_params(table, w1, b1, w2, b2)

    out = time_embedding_forward(t, wtab, bias, T=T, dim=dim)
    out = jax.block_until_ready(out)

    # Pure-JAX reference of the original (unpadded) math.
    emb_ref = jnp.take(table, t, axis=0)
    h_ref = emb_ref @ w1 + b1
    h_ref = h_ref * jax.nn.sigmoid(h_ref)
    ref = h_ref @ w2 + b2
    assert out.shape == (B, dim)
    assert jnp.allclose(out, ref, atol=1e-4, rtol=1e-4), float(
        jnp.max(jnp.abs(out - ref))
    )

    print("KERNEL_OK")
</pallas_src>

<mosaic_0001>
module attributes {stable_mosaic.version = 11 : i64} {
  func.func @_time_embed_kernel(%arg0: memref<8x1xi32, #tpu.memory_space<vmem>>, %arg1: memref<272x128xf32, #tpu.memory_space<vmem>>, %arg2: memref<2x128xf32, #tpu.memory_space<vmem>>, %arg3: memref<8x128xf32, #tpu.memory_space<vmem>>) attributes {dimension_semantics = [], scalar_prefetch = 0 : i64, scratch_operands = 0 : i64, tpu.core_type = #tpu.core_type<tc>} {
    %c0 = arith.constant 0 : index
    %c0_0 = arith.constant 0 : index
    %0 = vector.load %arg0[%c0, %c0_0] : memref<8x1xi32, #tpu.memory_space<vmem>>, vector<8x1xi32>
    %1 = tpu.iota {dimensions = array<i32: 1>} : vector<8x16xi32>
    %2 = vector.broadcast %0 : vector<8x1xi32> to vector<8x16xi32>
    %3 = arith.cmpi eq, %2, %1 : vector<8x16xi32>
    %4 = arith.extui %3 : vector<8x16xi1> to vector<8x16xi32>
    %5 = arith.sitofp %4 : vector<8x16xi32> to vector<8x16xf32>
    %c0_1 = arith.constant 0 : index
    %c0_2 = arith.constant 0 : index
    %6 = vector.load %arg1[%c0_1, %c0_2] : memref<272x128xf32, #tpu.memory_space<vmem>>, vector<16x128xf32>
    %cst = arith.constant dense<0.000000e+00> : vector<8x128xf32>
    %7 = tpu.matmul %5, %6, %cst {dimension_numbers = #tpu.dot_dimension_numbers<[1], [0], [0], [1], [0, 0, 1, 1], [], []>} : vector<8x16xf32>, vector<16x128xf32>, vector<8x128xf32> -> vector<8x128xf32>
    %c16 = arith.constant 16 : index
    %c0_3 = arith.constant 0 : index
    %8 = vector.load %arg1[%c16, %c0_3] : memref<272x128xf32, #tpu.memory_space<vmem>>, vector<128x128xf32>
    %c144 = arith.constant 144 : index
    %c0_4 = arith.constant 0 : index
    %9 = vector.load %arg1[%c144, %c0_4] : memref<272x128xf32, #tpu.memory_space<vmem>>, vector<128x128xf32>
    %cst_5 = arith.constant dense<0.000000e+00> : vector<8x128xf32>
    %10 = tpu.matmul %7, %8, %cst_5 {dimension_numbers = #tpu.dot_dimension_numbers<[1], [0], [0], [1], [0, 0, 1, 1], [], []>} : vector<8x128xf32>, vector<128x128xf32>, vector<8x128xf32> -> vector<8x128xf32>
    %c0_6 = arith.constant 0 : index
    %c0_7 = arith.constant 0 : index
    %11 = vector.load %arg2[%c0_6, %c0_7] : memref<2x128xf32, #tpu.memory_space<vmem>>, vector<1x128xf32>
    %12 = vector.broadcast %11 : vector<1x128xf32> to vector<8x128xf32>
    %13 = arith.addf %10, %12 : vector<8x128xf32>
    %cst_8 = arith.constant 0.000000e+00 : f32
    %14 = vector.broadcast %cst_8 : f32 to vector<8x128xf32>
    %15 = arith.subf %14, %13 : vector<8x128xf32>
    %16 = math.exp %15 : vector<8x128xf32>
    %cst_9 = arith.constant 1.000000e+00 : f32
    %17 = vector.broadcast %cst_9 : f32 to vector<8x128xf32>
    %18 = arith.addf %17, %16 : vector<8x128xf32>
    %cst_10 = arith.constant 1.000000e+00 : f32
    %19 = vector.broadcast %cst_10 : f32 to vector<8x128xf32>
    %20 = arith.divf %19, %18 : vector<8x128xf32>
    %21 = arith.mulf %13, %20 : vector<8x128xf32>
    %cst_11 = arith.constant dense<0.000000e+00> : vector<8x128xf32>
    %22 = tpu.matmul %21, %9, %cst_11 {dimension_numbers = #tpu.dot_dimension_numbers<[1], [0], [0], [1], [0, 0, 1, 1], [], []>} : vector<8x128xf32>, vector<128x128xf32>, vector<8x128xf32> -> vector<8x128xf32>
    %c1 = arith.constant 1 : index
    %c0_12 = arith.constant 0 : index
    %23 = vector.load %arg2[%c1, %c0_12] : memref<2x128xf32, #tpu.memory_space<vmem>>, vector<1x128xf32>
    %24 = vector.broadcast %23 : vector<1x128xf32> to vector<8x128xf32>
    %25 = arith.addf %22, %24 : vector<8x128xf32>
    %c0_13 = arith.constant 0 : index
    %c0_14 = arith.constant 0 : index
    %26 = vector.load %arg3[%c0_13, %c0_14] : memref<8x128xf32, #tpu.memory_space<vmem>>, vector<8x128xf32>
    tpu.vector_store %arg3[%c0_13, %c0_14], %25 {strides = array<i32>} : memref<8x128xf32, #tpu.memory_space<vmem>>, vector<8x128xf32>,
    return
  }
}

</mosaic_0001>

<llo_original>
// kernel: time_embedding_forward.1
$region0: #{time_embedding_forward.1}
  #allocation0 [shape = 'u32[]', space=smem, size = 0x4, offset = 0x4, fixed_abs, tag = 'smem constant byte address 0x4 - core index']
  #allocation1 [shape = 'u32[72,128]{1,0:T(1,128)}', space=vmem, size = 0x9000, scoped, tag = 'internal scratch']
  %s0 = inlined_call_operand.vmem [shape: s32[8,1], index: 0, kind: input, shape index: {}]
  %s1 = inlined_call_operand.hbm [shape: f32[272,128], index: 1, kind: input, shape index: {}]
  %s2 = inlined_call_operand.vmem [shape: f32[2,128], index: 2, kind: input, shape index: {}]
  %s3 = inlined_call_operand.hbm [shape: f32[8,128], index: 3, kind: output, shape index: {}]
  %s4 = sld [smem:[#allocation0]]
  $region26: #{time_embedding_forward.1} parent=0
    _
  %s6 = ssub.s32 1, %s4
  %s7 = scalar_select 0, %s6, %s4
  $region1: #{time_embedding_forward.1} parent=0
    #allocation2 [shape = 'u8[139264]{0}', space=vmem, size = 0x22000, scoped, tag = 'input window, operand 1, single buffered']
    #allocation3 [shape = 's32[1]{0}', space=sflag, size = 0x4, scoped, tag = 'scoped memory for time_embedding_forward.1']
    #allocation4 [shape = 's32[1]{0}', space=sflag, size = 0x4, scoped, tag = 'scoped memory for time_embedding_forward.1']
    #allocation5 [shape = 'u8[4096]{0}', space=vmem, size = 0x1000, scoped, tag = 'output window, operand 0, single buffered']
    %8 = vsyncpa [#allocation3], 0
    %9 = vsyncpa [#allocation4], 0
    // Predicated region
    $region2: #{time_embedding_forward.1} parent=1 // pred_check
      _
    $region3: #{time_embedding_forward.1} parent=1 // pred_check_branch
      %11 = sbr.rel (0) target = $region5
    $region4: #{time_embedding_forward.1} parent=1 // pred_region
      _
    $region5: #{time_embedding_forward.1} parent=1 // pred_fallthru
      _
    // Predicated region
    $region6: #{time_embedding_forward.1} parent=1 // pred_check
      _
    $region7: #{time_embedding_forward.1} parent=1 // pred_check_branch
      %13 = sbr.rel (0) target = $region9
    $region8: #{time_embedding_forward.1} parent=1 // pred_region
      %15 = vsyncadd [#allocation3], 0
      %s16 = sshll.u32 %s1, 4
      %s17 = int_to_ptr.hbm [resolvable:$true] %s16
      %s18 = sshll.u32 [#allocation2], 4
      %s19 = int_to_ptr.vmem [resolvable:$true] %s18
      %24 = dma.hbm_to_vmem [thread:$0]  %s17, 4352, %s19, [#allocation3], 128, 128, 8
    $region9: #{time_embedding_forward.1} parent=1 // pred_fallthru
      _
    // Predicated region
    $region10: #{time_embedding_forward.1} parent=1 // pred_check
      _
    $region11: #{time_embedding_forward.1} parent=1 // pred_check_branch
      %26 = sbr.rel (0) target = $region13
    $region12: #{time_embedding_forward.1} parent=1 // pred_region
      _
    $region13: #{time_embedding_forward.1} parent=1 // pred_fallthru
      _
    // Predicated region
    $region14: #{time_embedding_forward.1} parent=1 // pred_check
      _
    $region15: #{time_embedding_forward.1} parent=1 // pred_check_branch
      %28 = sbr.rel (0) target = $region17
    $region16: #{time_embedding_forward.1} parent=1 // pred_region
      %30 = dma.done [#allocation3], 4352
    $region17: #{time_embedding_forward.1} parent=1 // pred_fallthru
      _
    %v31 = vld [vmem:[%s0] sm:$0xff]
    %v32 = vlaneseq
    %v33 = vand.u32 %v32, 127
    %34 = vset.pattern.permute.xlu0 0
    %35 = vperm.xlu0 %34, %v31
    %v36 = vpop.permute.xlu0 %35
    %vm37 = vcmp.eq.s32.totalorder %v36, %v33
    %v38 = vsel %vm37, 1, 0
    %v39 = vcvt.s32.f32 %v38
    %v40 = vld [vmem:[#allocation2] sm:$0xff]
    %v41 = vld [vmem:[#allocation2 + $0x8] sm:$0xff]
    %vm42 = vcmask 130048
    %v44 = vsel %vm42, %v39, 0
    %46 = vmatpush.msra.mxu0 0.0
    %47 = vmatpush.msra.mxu0 0.0
    %48 = vmatpush.msra.mxu0 0.0
    %49 = vmatpush.msra.mxu0 0.0
    %50 = vmatpush.msra.mxu0 0.0
    %51 = vmatpush.msra.mxu0 0.0
    %52 = vmatpush.msra.mxu0 0.0
    %53 = vmatpush.msra.mxu0 0.0
    %54 = vmatpush.msra.mxu0 0.0
    %55 = vmatpush.msra.mxu0 0.0
    %56 = vmatpush.msra.mxu0 0.0
    %57 = vmatpush.msra.mxu0 0.0
    %58 = vmatpush.msra.mxu0 0.0
    %59 = vmatpush.msra.mxu0 0.0
    %60 = vmatpush.msra.mxu0 %v41
    %61 = vmatpush.msra.mxu0 %v40
    %62 = vmatmul.f32.gmra.mxu0 %v44
    %v63 = vpop.f32.mrf.mxu0
    %v64 = vadd.f32 0.0, %v63
    %65 = vdwg.mxu0
    %v66 = vld [vmem:[#allocation2 + $0x10] sm:$0xff]
    %v67 = vld [vmem:[#allocation2 + $0x18] sm:$0xff]
    %v68 = vld [vmem:[#allocation2 + $0x20] sm:$0xff]
    %v69 = vld [vmem:[#allocation2 + $0x28] sm:$0xff]
    %v70 = vld [vmem:[#allocation2 + $0x30] sm:$0xff]
    %v71 = vld [vmem:[#allocation2 + $0x38] sm:$0xff]
    %v72 = vld [vmem:[#allocation2 + $0x40] sm:$0xff]
    %v73 = vld [vmem:[#allocation2 + $0x48] sm:$0xff]
    %v74 = vld [vmem:[#allocation2 + $0x50] sm:$0xff]
    %v75 = vld [vmem:[#allocation2 + $0x58] sm:$0xff]
    %v76 = vld [vmem:[#allocation2 + $0x60] sm:$0xff]
    %v77 = vld [vmem:[#allocation2 + $0x68] sm:$0xff]
    %v78 = vld [vmem:[#allocation2 + $0x70] sm:$0xff]
    %v79 = vld [vmem:[#allocation2 + $0x78] sm:$0xff]
    %v80 = vld [vmem:[#allocation2 + $0x80] sm:$0xff]
    %v81 = vld [vmem:[#allocation2 + $0x88] sm:$0xff]
    %v82 = vld [vmem:[#allocation2 + $0x90] sm:$0xff]
    %v83 = vld [vmem:[#allocation2 + $0x98] sm:$0xff]
    %v84 = vld [vmem:[#allocation2 + $0xa0] sm:$0xff]
    %v85 = vld [vmem:[#allocation2 + $0xa8] sm:$0xff]
    %v86 = vld [vmem:[#allocation2 + $0xb0] sm:$0xff]
    %v87 = vld [vmem:[#allocation2 + $0xb8] sm:$0xff]
    %v88 = vld [vmem:[#allocation2 + $0xc0] sm:$0xff]
    %v89 = vld [vmem:[#allocation2 + $0xc8] sm:$0xff]
    %v90 = vld [vmem:[#allocation2 + $0xd0] sm:$0xff]
    %v91 = vld [vmem:[#allocation2 + $0xd8] sm:$0xff]
    %v92 = vld [vmem:[#allocation2 + $0xe0] sm:$0xff]
    %v93 = vld [vmem:[#allocation2 + $0xe8] sm:$0xff]
    %v94 = vld [vmem:[#allocation2 + $0xf0] sm:$0xff]
    %v95 = vld [vmem:[#allocation2 + $0xf8] sm:$0xff]
    %v96 = vld [vmem:[#allocation2 + $0x100] sm:$0xff]
    %v97 = vld [vmem:[#allocation2 + $0x108] sm:$0xff]
    %v98 = vld [vmem:[%s2] sm:$0x1]
    %v99 = vperm.slane %v98, 0
    %100 = vmatpush.msra.mxu0 %v81
    %101 = vmatpush.msra.mxu0 %v80
    %102 = vmatpush.msra.mxu0 %v79
    %103 = vmatpush.msra.mxu0 %v78
    %104 = vmatpush.msra.mxu0 %v77
    %105 = vmatpush.msra.mxu0 %v76
    %106 = vmatpush.msra.mxu0 %v75
    %107 = vmatpush.msra.mxu0 %v74
    %108 = vmatpush.msra.mxu0 %v73
    %109 = vmatpush.msra.mxu0 %v72
    %110 = vmatpush.msra.mxu0 %v71
    %111 = vmatpush.msra.mxu0 %v70
    %112 = vmatpush.msra.mxu0 %v69
    %113 = vmatpush.msra.mxu0 %v68
    %114 = vmatpush.msra.mxu0 %v67
    %115 = vmatpush.msra.mxu0 %v66
    %116 = vmatmul.f32.gmra.mxu0 %v64
    %v117 = vpop.f32.mrf.mxu0
    %v118 = vadd.f32 %v99, %v117
    %119 = vdwg.mxu0
    %v120 = vsub.f32 0.0, %v118
    %v121 = vmul.f32 %v120, 1.442695
    %v122 = vpow.pop %v121
    %v123 = vadd.f32 %v122, 1.0
    %v124 = vrcp.pop %v123
    %v125 = vmul.f32 %v123, %v124
    %v126 = vsub.f32 1.0, %v125
    %v127 = vmul.f32 %v124, %v126
    %v128 = vadd.f32 %v124, %v127
    %vm129 = vweird.f32 %v123
    %vm130 = vweird.f32 %v124
    %vm131 = vmor %vm129, %vm130
    %v132 = vsel %vm131, %v124, %v128
    %v133 = vand.u32 2147483647, %v123
    %vm134 = vcmp.eq.f32.partialorder %v133, 8.507059e+37
    %v135 = vand.u32 %v123, 2147483648
    %v136 = vor.u32 1.1754944e-38, %v135
    %v137 = vsel %vm134, %v136, %v132
    %v138 = vmul.f32 1.0, %v137
    %v139 = vmul.f32 %v118, %v138
    %v140 = vld [vmem:[%s2 + $0x1] sm:$0x1]
    %v141 = vperm.slane %v140, 0
    %142 = vmatpush.msra.mxu0 %v97
    %143 = vmatpush.msra.mxu0 %v96
    %144 = vmatpush.msra.mxu0 %v95
    %145 = vmatpush.msra.mxu0 %v94
    %146 = vmatpush.msra.mxu0 %v93
    %147 = vmatpush.msra.mxu0 %v92
    %148 = vmatpush.msra.mxu0 %v91
    %149 = vmatpush.msra.mxu0 %v90
    %150 = vmatpush.msra.mxu0 %v89
    %151 = vmatpush.msra.mxu0 %v88
    %152 = vmatpush.msra.mxu0 %v87
    %153 = vmatpush.msra.mxu0 %v86
    %154 = vmatpush.msra.mxu0 %v85
    %155 = vmatpush.msra.mxu0 %v84
    %156 = vmatpush.msra.mxu0 %v83
    %157 = vmatpush.msra.mxu0 %v82
    %158 = vmatmul.f32.gmra.mxu0 %v139
    %v159 = vpop.f32.mrf.mxu0
    %v160 = vadd.f32 %v141, %v159
    %161 = vdwg.mxu0
    %162 = vst [vmem:[#allocation5] sm:$0xff] %v160
    // Predicated region
    $region18: #{time_embedding_forward.1} parent=1 // pred_check
      _
    $region19: #{time_embedding_forward.1} parent=1 // pred_check_branch
      %164 = sbr.rel (0) target = $region21
    $region20: #{time_embedding_forward.1} parent=1 // pred_region
      %166 = vsyncadd [#allocation4], 0
      %s168 = sshll.u32 [#allocation5], 4
      %s169 = int_to_ptr.vmem [resolvable:$true] %s168
      %s170 = sshll.u32 %s3, 4
      %s171 = int_to_ptr.hbm [resolvable:$true] %s170
      %173 = dma.vmem_to_hbm [thread:$0]  %s169, 128, %s171, [#allocation4]
    $region21: #{time_embedding_forward.1} parent=1 // pred_fallthru
      _
    // Predicated region
    $region22: #{time_embedding_forward.1} parent=1 // pred_check
      _
    $region23: #{time_embedding_forward.1} parent=1 // pred_check_branch
      %175 = sbr.rel (0) target = $region25
    $region24: #{time_embedding_forward.1} parent=1 // pred_region
      %177 = dma.done [#allocation4], 128
    $region25: #{time_embedding_forward.1} parent=1 // pred_fallthru
      _
    %178 = vsyncpa [#allocation3], 1
    %179 = vsyncpa [#allocation4], 1

</llo_original>
